<compile_context>
chip_gen: v6e
topology: v6e:2x2x1
jax: 0.10.0
libtpu: 0.0.40
codegen_flags: <defaults>
</compile_context>

<pallas_src>
import functools
import math

import jax
import jax.numpy as jnp
from jax.experimental import pallas as pl
from jax.experimental.pallas import tpu as pltpu

LANES = 128
SUBLANES = 8
MAX_ROW_TILE = 2048  # 2048 rows x 128 lanes x 4B = 1 MiB per f32 input tile


def _balanced_l1(diff, *, alpha, gamma, beta):
    # All of these are compile-time Python floats.
    b = math.exp(gamma / alpha) - 1.0
    inv_beta = 1.0 / beta
    alpha_over_b = alpha / b
    large_const = gamma / b - alpha * beta
    small = (alpha_over_b * (b * diff + 1.0) * jnp.log(b * (diff * inv_beta) + 1.0)
             - alpha * diff)
    large = gamma * diff + large_const
    return jnp.where(diff < beta, small, large)


def _partial_sum_kernel(x_ref, t_ref, o_ref, *, alpha, gamma, beta):
    # Load in input dtype, compute in f32.
    x = x_ref[...].astype(jnp.float32)
    t = t_ref[...].astype(jnp.float32)
    diff = jnp.abs(x - t)
    loss = _balanced_l1(diff, alpha=alpha, gamma=gamma, beta=beta)
    rows = loss.shape[0]
    # Reduce the (rows, 128) tile to a single (8, 128) vreg-shaped partial sum.
    # This is a stack-of-vregs add on the VPU (no cross-lane traffic).
    partial = jnp.sum(loss.reshape(rows // SUBLANES, SUBLANES, LANES), axis=0)
    o_ref[...] = partial[None, :, :]  # (1, 8, 128)


def _none_kernel(x_ref, t_ref, o_ref, *, alpha, gamma, beta):
    x = x_ref[...].astype(jnp.float32)
    t = t_ref[...].astype(jnp.float32)
    diff = jnp.abs(x - t)
    loss = _balanced_l1(diff, alpha=alpha, gamma=gamma, beta=beta)
    o_ref[...] = loss.astype(o_ref.dtype)


def balanced_l1_loss(inputs, targets, *, alpha=0.5, gamma=1.5, beta=1.0,
                     reduction="mean"):
    assert beta > 0
    assert reduction in ("none", "mean", "sum")
    assert inputs.shape == targets.shape

    orig_shape = inputs.shape
    in_dtype = inputs.dtype
    out_dtype = in_dtype if jnp.issubdtype(in_dtype, jnp.floating) else jnp.float32

    n = int(inputs.size)

    # Flatten to a lane-dense (rows, 128) slab; pick the largest row tile that
    # fits the data (capped at MAX_ROW_TILE) and pad rows to a multiple of it.
    rows_needed = -(-n // LANES)
    row_tile = min(MAX_ROW_TILE, -(-rows_needed // SUBLANES) * SUBLANES)
    rows = -(-rows_needed // row_tile) * row_tile
    pad = rows * LANES - n

    x2 = jnp.pad(inputs.reshape(-1), (0, pad)).reshape(rows, LANES)
    t2 = jnp.pad(targets.reshape(-1), (0, pad)).reshape(rows, LANES)
    num_blocks = rows // row_tile

    if reduction == "none":
        kern = functools.partial(_none_kernel, alpha=alpha, gamma=gamma, beta=beta)
        out2 = pl.pallas_call(
            kern,
            out_shape=jax.ShapeDtypeStruct((rows, LANES), out_dtype),
            grid=(num_blocks,),
            in_specs=[
                pl.BlockSpec((row_tile, LANES), lambda i: (i, 0)),
                pl.BlockSpec((row_tile, LANES), lambda i: (i, 0)),
            ],
            out_specs=pl.BlockSpec((row_tile, LANES), lambda i: (i, 0)),
            compiler_params=pltpu.CompilerParams(
                dimension_semantics=("parallel",)),
        )(x2, t2)
        return out2.reshape(-1)[:n].reshape(orig_shape)

    # Reduction path: each grid block writes its own (8, 128) partial sum.
    # Padding elements contribute exactly 0 (diff=0 -> log(1)=0), so no mask.
    kern = functools.partial(_partial_sum_kernel, alpha=alpha, gamma=gamma, beta=beta)
    partials = pl.pallas_call(
        kern,
        out_shape=jax.ShapeDtypeStruct((num_blocks, SUBLANES, LANES), jnp.float32),
        grid=(num_blocks,),
        in_specs=[
            pl.BlockSpec((row_tile, LANES), lambda i: (i, 0)),
            pl.BlockSpec((row_tile, LANES), lambda i: (i, 0)),
        ],
        out_specs=pl.BlockSpec((1, SUBLANES, LANES), lambda i: (i, 0, 0)),
        compiler_params=pltpu.CompilerParams(
            dimension_semantics=("parallel",)),
    )(x2, t2)

    total = jnp.sum(partials, dtype=jnp.float32)
    if reduction == "sum":
        return total
    return total / jnp.float32(n)  # mean


def _reference(inputs, targets, alpha=0.5, gamma=1.5, beta=1.0, reduction="mean"):
    diff = jnp.abs(inputs.astype(jnp.float32) - targets.astype(jnp.float32))
    b = math.exp(gamma / alpha) - 1.0
    loss = jnp.where(
        diff < beta,
        alpha / b * (b * diff + 1.0) * jnp.log(b * (diff / beta) + 1.0) - alpha * diff,
        gamma * diff + (gamma / b - alpha * beta),
    )
    if reduction == "mean":
        return jnp.mean(loss)
    if reduction == "sum":
        return jnp.sum(loss)
    return loss


if __name__ == "__main__":
    key = jax.random.PRNGKey(0)
    k1, k2 = jax.random.split(key)
    # Small NCHW regression maps.
    x = jax.random.normal(k1, (2, 4, 16, 16), dtype=jnp.float32) * 2.0
    t = jax.random.normal(k2, (2, 4, 16, 16), dtype=jnp.float32) * 2.0

    out_mean = jax.block_until_ready(balanced_l1_loss(x, t, reduction="mean"))
    ref_mean = _reference(x, t, reduction="mean")
    assert jnp.allclose(out_mean, ref_mean, rtol=1e-5, atol=1e-5), (out_mean, ref_mean)

    out_sum = jax.block_until_ready(balanced_l1_loss(x, t, reduction="sum"))
    ref_sum = _reference(x, t, reduction="sum")
    assert jnp.allclose(out_sum, ref_sum, rtol=1e-5, atol=1e-5), (out_sum, ref_sum)

    out_none = jax.block_until_ready(balanced_l1_loss(x, t, reduction="none"))
    ref_none = _reference(x, t, reduction="none")
    assert out_none.shape == x.shape
    assert jnp.allclose(out_none, ref_none, rtol=1e-5, atol=1e-5)

    print("KERNEL_OK")
</pallas_src>

<mosaic_0001>
module attributes {stable_mosaic.version = 11 : i64} {
  func.func @_partial_sum_kernel(%arg0: i32, %arg1: memref<16x128xf32, #tpu.memory_space<vmem>>, %arg2: memref<16x128xf32, #tpu.memory_space<vmem>>, %arg3: memref<1x8x128xf32, #tpu.memory_space<vmem>>) attributes {dimension_semantics = [#tpu.dimension_semantics<parallel>], iteration_bounds = array<i64: 1>, scalar_prefetch = 0 : i64, scratch_operands = 0 : i64, tpu.core_type = #tpu.core_type<tc>, window_params = [{transform_indices = @transform_0, window_bounds = array<i64: 16, 128>}, {transform_indices = @transform_1, window_bounds = array<i64: 16, 128>}, {transform_indices = @transform_2, window_bounds = array<i64: 1, 8, 128>}]} {
    %c0 = arith.constant 0 : index
    %c0_0 = arith.constant 0 : index
    %0 = vector.load %arg1[%c0, %c0_0] : memref<16x128xf32, #tpu.memory_space<vmem>>, vector<16x128xf32>
    %c0_1 = arith.constant 0 : index
    %c0_2 = arith.constant 0 : index
    %1 = vector.load %arg2[%c0_1, %c0_2] : memref<16x128xf32, #tpu.memory_space<vmem>>, vector<16x128xf32>
    %2 = arith.subf %0, %1 : vector<16x128xf32>
    %3 = math.absf %2 : vector<16x128xf32>
    %cst = arith.constant 19.085537 : f32
    %4 = vector.broadcast %cst : f32 to vector<16x128xf32>
    %5 = arith.mulf %4, %3 : vector<16x128xf32>
    %cst_3 = arith.constant 1.000000e+00 : f32
    %6 = vector.broadcast %cst_3 : f32 to vector<16x128xf32>
    %7 = arith.addf %5, %6 : vector<16x128xf32>
    %cst_4 = arith.constant 0.0261978488 : f32
    %8 = vector.broadcast %cst_4 : f32 to vector<16x128xf32>
    %9 = arith.mulf %8, %7 : vector<16x128xf32>
    %cst_5 = arith.constant 1.000000e+00 : f32
    %10 = vector.broadcast %cst_5 : f32 to vector<16x128xf32>
    %11 = arith.mulf %3, %10 : vector<16x128xf32>
    %cst_6 = arith.constant 19.085537 : f32
    %12 = vector.broadcast %cst_6 : f32 to vector<16x128xf32>
    %13 = arith.mulf %12, %11 : vector<16x128xf32>
    %cst_7 = arith.constant 1.000000e+00 : f32
    %14 = vector.broadcast %cst_7 : f32 to vector<16x128xf32>
    %15 = arith.addf %13, %14 : vector<16x128xf32>
    %16 = math.log %15 : vector<16x128xf32>
    %17 = arith.mulf %9, %16 : vector<16x128xf32>
    %cst_8 = arith.constant 5.000000e-01 : f32
    %18 = vector.broadcast %cst_8 : f32 to vector<16x128xf32>
    %19 = arith.mulf %18, %3 : vector<16x128xf32>
    %20 = arith.subf %17, %19 : vector<16x128xf32>
    %cst_9 = arith.constant 1.500000e+00 : f32
    %21 = vector.broadcast %cst_9 : f32 to vector<16x128xf32>
    %22 = arith.mulf %21, %3 : vector<16x128xf32>
    %cst_10 = arith.constant -0.421406448 : f32
    %23 = vector.broadcast %cst_10 : f32 to vector<16x128xf32>
    %24 = arith.addf %22, %23 : vector<16x128xf32>
    %cst_11 = arith.constant 1.000000e+00 : f32
    %25 = vector.broadcast %cst_11 : f32 to vector<16x128xf32>
    %26 = arith.cmpf olt, %3, %25 : vector<16x128xf32>
    %27 = arith.select %26, %20, %24 : vector<16x128xi1>, vector<16x128xf32>
    %28 = vector.shape_cast %27 : vector<16x128xf32> to vector<2x8x128xf32>
    %cst_12 = arith.constant dense<0.000000e+00> : vector<8x128xf32>
    %29 = vector.multi_reduction <add>, %28, %cst_12 [0] : vector<2x8x128xf32> to vector<8x128xf32>
    %30 = vector.shape_cast %29 : vector<8x128xf32> to vector<1x8x128xf32>
    %c0_13 = arith.constant 0 : index
    %c0_14 = arith.constant 0 : index
    %c0_15 = arith.constant 0 : index
    %31 = vector.load %arg3[%c0_13, %c0_14, %c0_15] : memref<1x8x128xf32, #tpu.memory_space<vmem>>, vector<1x8x128xf32>
    tpu.vector_store %arg3[%c0_13, %c0_14, %c0_15], %30 {strides = array<i32>} : memref<1x8x128xf32, #tpu.memory_space<vmem>>, vector<1x8x128xf32>,
    return
  }
  func.func @transform_0(%arg0: i32) -> (i32, i32) {
    %c0_i32 = arith.constant 0 : i32
    %c0_i32_0 = arith.constant 0 : i32
    return %arg0, %c0_i32 : i32, i32
  }
  func.func @transform_1(%arg0: i32) -> (i32, i32) {
    %c0_i32 = arith.constant 0 : i32
    %c0_i32_0 = arith.constant 0 : i32
    return %arg0, %c0_i32 : i32, i32
  }
  func.func @transform_2(%arg0: i32) -> (i32, i32, i32) {
    %c0_i32 = arith.constant 0 : i32
    %c0_i32_0 = arith.constant 0 : i32
    %c0_i32_1 = arith.constant 0 : i32
    return %arg0, %c0_i32, %c0_i32_0 : i32, i32, i32
  }
}

</mosaic_0001>

<llo_original>
// kernel: tpu_custom_call.1
$region0: #{tpu_custom_call.1}
  #allocation0 [shape = 'u32[]', space=smem, size = 0x4, offset = 0x4, fixed_abs, tag = 'smem constant byte address 0x4 - core index']
  #allocation1 [shape = 'u32[144,128]{1,0:T(1,128)}', space=vmem, size = 0x12000, scoped, tag = 'internal scratch']
  %s0 = inlined_call_operand.hbm [shape: f32[16,128], index: 0, kind: input, shape index: {}]
  %s1 = inlined_call_operand.hbm [shape: f32[16,128], index: 1, kind: input, shape index: {}]
  %s2 = inlined_call_operand.hbm [shape: f32[1,8,128], index: 2, kind: output, shape index: {}]
  %s3 = sld [smem:[#allocation0]]
  $region26: #{tpu_custom_call.1} parent=0
    _
  %s5 = ssub.s32 1, %s3
  %s6 = scalar_select 0, %s5, %s3
  $region1: #{tpu_custom_call.1} parent=0
    #allocation2 [shape = 'u8[8192]{0}', space=vmem, size = 0x2000, scoped, tag = 'input window, operand 0, single buffered']
    #allocation3 [shape = 's32[1]{0}', space=sflag, size = 0x4, scoped, tag = 'scoped memory for tpu_custom_call.1']
    #allocation4 [shape = 's32[1]{0}', space=sflag, size = 0x4, scoped, tag = 'scoped memory for tpu_custom_call.1']
    #allocation5 [shape = 'u8[8192]{0}', space=vmem, size = 0x2000, scoped, tag = 'input window, operand 1, single buffered']
    #allocation6 [shape = 's32[1]{0}', space=sflag, size = 0x4, scoped, tag = 'scoped memory for tpu_custom_call.1']
    #allocation7 [shape = 'u8[4096]{0}', space=vmem, size = 0x1000, scoped, tag = 'output window, operand 0, single buffered']
    %7 = vsyncpa [#allocation3], 0
    %8 = vsyncpa [#allocation6], 0
    %9 = vsyncpa [#allocation4], 0
    // Predicated region
    $region2: #{tpu_custom_call.1} parent=1 // pred_check
      _
    $region3: #{tpu_custom_call.1} parent=1 // pred_check_branch
      %11 = sbr.rel (0) target = $region5
    $region4: #{tpu_custom_call.1} parent=1 // pred_region
      %s13 = ssub.s32 256, 256
      %14 = vsyncadd [#allocation3], %s13
      %s15 = sshll.u32 [#allocation2], 4
      %s16 = int_to_ptr.vmem [resolvable:$true] %s15
      %21 = dma.hbm_to_vmem [thread:$0]  %s0, 256, %s16, [#allocation3], 128, 128, 8
    $region5: #{tpu_custom_call.1} parent=1 // pred_fallthru
      _
    // Predicated region
    $region6: #{tpu_custom_call.1} parent=1 // pred_check
      _
    $region7: #{tpu_custom_call.1} parent=1 // pred_check_branch
      %23 = sbr.rel (0) target = $region9
    $region8: #{tpu_custom_call.1} parent=1 // pred_region
      %s25 = ssub.s32 256, 256
      %26 = vsyncadd [#allocation6], %s25
      %s27 = sshll.u32 [#allocation5], 4
      %s28 = int_to_ptr.vmem [resolvable:$true] %s27
      %33 = dma.hbm_to_vmem [thread:$0]  %s1, 256, %s28, [#allocation6], 128, 128, 8
    $region9: #{tpu_custom_call.1} parent=1 // pred_fallthru
      _
    // Predicated region
    $region10: #{tpu_custom_call.1} parent=1 // pred_check
      _
    $region11: #{tpu_custom_call.1} parent=1 // pred_check_branch
      %35 = sbr.rel (0) target = $region13
    $region12: #{tpu_custom_call.1} parent=1 // pred_region
      %36 = dma.done [#allocation3], 256
    $region13: #{tpu_custom_call.1} parent=1 // pred_fallthru
      _
    // Predicated region
    $region14: #{tpu_custom_call.1} parent=1 // pred_check
      _
    $region15: #{tpu_custom_call.1} parent=1 // pred_check_branch
      %38 = sbr.rel (0) target = $region17
    $region16: #{tpu_custom_call.1} parent=1 // pred_region
      %39 = dma.done [#allocation6], 256
    $region17: #{tpu_custom_call.1} parent=1 // pred_fallthru
      _
    %v40 = vld [vmem:[#allocation2] sm:$0xff]
    %v41 = vld [vmem:[#allocation2 + $0x8] sm:$0xff]
    %v42 = vld [vmem:[#allocation5] sm:$0xff]
    %v43 = vld [vmem:[#allocation5 + $0x8] sm:$0xff]
    %v44 = vsub.f32 %v40, %v42
    %v45 = vsub.f32 %v41, %v43
    %v46 = vand.u32 2147483647, %v44
    %v47 = vand.u32 2147483647, %v45
    %v48 = vmul.f32 %v46, 19.085537
    %v49 = vmul.f32 %v47, 19.085537
    %v50 = vadd.f32 %v48, 1.0
    %v51 = vadd.f32 %v49, 1.0
    %v52 = vmul.f32 %v50, 0.026197849
    %v53 = vmul.f32 %v51, 0.026197849
    %v54 = vlog2.pop %v50
    %v55 = vmul.f32 %v54, 0.6931472
    %v56 = vlog2.pop %v51
    %v57 = vmul.f32 %v56, 0.6931472
    %v58 = vmul.f32 %v52, %v55
    %v59 = vmul.f32 %v53, %v57
    %v60 = vmul.f32 %v46, 0.5
    %v61 = vmul.f32 %v47, 0.5
    %v62 = vsub.f32 %v58, %v60
    %v63 = vsub.f32 %v59, %v61
    %v64 = vmul.f32 %v46, 1.5
    %v65 = vmul.f32 %v47, 1.5
    %v66 = vadd.f32 %v64, -0.42140645
    %v67 = vadd.f32 %v65, -0.42140645
    %vm68 = vcmp.lt.f32.partialorder %v46, 1.0
    %vm69 = vcmp.lt.f32.partialorder %v47, 1.0
    %v70 = vsel %vm68, %v62, %v66
    %v71 = vsel %vm69, %v63, %v67
    %v72 = vadd.f32 %v70, %v71
    %73 = vst [vmem:[#allocation7] sm:$0xff] %v72
    // Predicated region
    $region18: #{tpu_custom_call.1} parent=1 // pred_check
      _
    $region19: #{tpu_custom_call.1} parent=1 // pred_check_branch
      %75 = sbr.rel (0) target = $region21
    $region20: #{tpu_custom_call.1} parent=1 // pred_region
      %s77 = ssub.s32 128, 128
      %78 = vsyncadd [#allocation4], %s77
      %s80 = sshll.u32 [#allocation7], 4
      %s81 = int_to_ptr.vmem [resolvable:$true] %s80
      %83 = dma.vmem_to_hbm [thread:$0]  %s81, 128, %s2, [#allocation4]
    $region21: #{tpu_custom_call.1} parent=1 // pred_fallthru
      _
    // Predicated region
    $region22: #{tpu_custom_call.1} parent=1 // pred_check
      _
    $region23: #{tpu_custom_call.1} parent=1 // pred_check_branch
      %85 = sbr.rel (0) target = $region25
    $region24: #{tpu_custom_call.1} parent=1 // pred_region
      %86 = dma.done [#allocation4], 128
    $region25: #{tpu_custom_call.1} parent=1 // pred_fallthru
      _
    %87 = vsyncpa [#allocation3], 1
    %88 = vsyncpa [#allocation6], 1
    %89 = vsyncpa [#allocation4], 1

</llo_original>
